<compile_context>
chip_gen: v5e
topology: v5e:2x2
jax: 0.10.0
libtpu: 0.0.40
codegen_flags: <defaults>
</compile_context>

<pallas_src>
import jax
import jax.numpy as jnp
from jax.experimental import pallas as pl
from jax.experimental.pallas import tpu as pltpu

FEATURE_DIM = 768          # ViT-Base hidden size (in_features of each head)
NUM_HEADS = 3              # EF40, TR0, MR0
OUT_PAD = 8                # padded output width (block last dim == full array dim -> legal)
DEFAULT_TB = 2048          # batch tile (f32 x tile = 6.3 MiB; double-buffered fits all gens)
MIN_TB = 256               # don't split tiles below this (per-step overhead dominates)
VMEM_LIMIT_BYTES = 48 * 1024 * 1024   # > v5e 16 MiB scoped default, < v7x 64 MiB physical


def _round_up(a, m):
    return ((a + m - 1) // m) * m


def multihead_kernel(x_ref, w_ref, b_ref, o_ref):
    """x: (TB, 768) f32/bf16, w: (768, 8) bf16, b: (1, 8) f32 -> o = sigmoid(x @ w + b)."""
    x_bf = x_ref[...].astype(jnp.bfloat16)      # in-kernel cast (no-op if already bf16)
    logits = jnp.dot(x_bf, w_ref[...], preferred_element_type=jnp.float32)
    o_ref[...] = jax.nn.sigmoid(logits + b_ref[...]).astype(o_ref.dtype)


def multihead_vit_heads(x, w_stacked, b_stacked, *, tb=DEFAULT_TB):
    """Fused three-head forward.  x: (B, 768) f32 or bf16.  Returns (l0, l1, l2), each (B, 1) f32."""
    B, D = x.shape
    assert D == FEATURE_DIM
    assert w_stacked.shape == (FEATURE_DIM, OUT_PAD)
    assert b_stacked.shape == (1, OUT_PAD)

    # Weights are constant; init_params already provides the kernel dtypes (no per-call cast).
    w_bf = w_stacked if w_stacked.dtype == jnp.bfloat16 else w_stacked.astype(jnp.bfloat16)
    b_f32 = b_stacked if b_stacked.dtype == jnp.float32 else b_stacked.astype(jnp.float32)

    # Batch tile: multiple of 8, aim for >= 2 tiles so v7x's two TensorCores both get work,
    # but never split below MIN_TB (per-step overhead) nor above the requested tb.
    tb_eff = min(tb, max(MIN_TB, _round_up(pl.cdiv(B, 2), 8)))
    if tb_eff >= B:
        tb_eff = B                      # one full-batch tile; full-dim block is always legal
    grid = (pl.cdiv(B, tb_eff),)        # ragged last tile handled by Pallas (no jnp.pad copy)

    cost = pl.CostEstimate(
        flops=2 * B * D * NUM_HEADS,
        transcendentals=B * NUM_HEADS,
        bytes_accessed=(B * D * jnp.dtype(x.dtype).itemsize
                        + D * OUT_PAD * 2 + OUT_PAD * 4 + B * OUT_PAD * 4),
    )

    out = pl.pallas_call(
        multihead_kernel,
        out_shape=jax.ShapeDtypeStruct((B, OUT_PAD), jnp.float32),
        grid=grid,
        in_specs=[
            pl.BlockSpec((tb_eff, D), lambda i: (i, 0)),      # batch-tiled x (pipelined DMAs)
            pl.BlockSpec((D, OUT_PAD), lambda i: (0, 0)),     # weights resident across tiles
            pl.BlockSpec((1, OUT_PAD), lambda i: (0, 0)),     # bias resident across tiles
        ],
        out_specs=pl.BlockSpec((tb_eff, OUT_PAD), lambda i: (i, 0)),
        compiler_params=pltpu.CompilerParams(
            dimension_semantics=("parallel",),                # independent tiles -> megacore
            vmem_limit_bytes=VMEM_LIMIT_BYTES,
        ),
        cost_estimate=cost,
    )(x, w_bf, b_f32)

    heads = out[:, :NUM_HEADS]          # single narrow slice: 12 B/row of useful data
    return heads[:, 0:1], heads[:, 1:2], heads[:, 2:3]


def init_params(key):
    """Deterministic init matching nn.Linear(768, 1) default (U[-1/sqrt(768), 1/sqrt(768)]).

    Returns the stacked, kernel-dtype parameters (bf16 weights, f32 bias) plus the raw
    per-head f32 parameters for the reference.
    """
    bound = 1.0 / jnp.sqrt(jnp.float32(FEATURE_DIM))
    keys = jax.random.split(key, 2 * NUM_HEADS)
    ws, bs = [], []
    for h in range(NUM_HEADS):
        ws.append(jax.random.uniform(keys[2 * h], (FEATURE_DIM, 1),
                                     minval=-bound, maxval=bound, dtype=jnp.float32))
        bs.append(jax.random.uniform(keys[2 * h + 1], (1,),
                                     minval=-bound, maxval=bound, dtype=jnp.float32))
    w_stacked = jnp.zeros((FEATURE_DIM, OUT_PAD), jnp.float32)
    w_stacked = w_stacked.at[:, :NUM_HEADS].set(jnp.concatenate(ws, axis=1))
    b_stacked = jnp.zeros((1, OUT_PAD), jnp.float32)
    b_stacked = b_stacked.at[0, :NUM_HEADS].set(jnp.concatenate(bs, axis=0))
    # Pre-materialize kernel dtypes once (constant weights; avoids per-call casts).
    return w_stacked.astype(jnp.bfloat16), b_stacked, ws, bs


def reference(x, ws, bs):
    """Plain-JAX reference with the same bf16-quantized inputs / f32 accumulation."""
    xq = x.astype(jnp.bfloat16).astype(jnp.float32)
    outs = []
    for w, b in zip(ws, bs):
        wq = w.astype(jnp.bfloat16).astype(jnp.float32)
        logits = jax.lax.dot_general(xq, wq, (((1,), (0,)), ((), ())),
                                     precision=jax.lax.Precision.HIGHEST)
        outs.append(jax.nn.sigmoid(logits + b[None, :]))
    return tuple(outs)


if __name__ == "__main__":
    key = jax.random.PRNGKey(0)
    k_param, k_x, k_x2 = jax.random.split(key, 3)

    w_stacked, b_stacked, ws, bs = init_params(k_param)

    # Small batch of 'getitem_5' ViT features: (B, 768) f32, B not a multiple of 8.
    B = 2
    x = jax.random.normal(k_x, (B, FEATURE_DIM), dtype=jnp.float32)
    l0, l1, l2 = multihead_vit_heads(x, w_stacked, b_stacked)
    jax.block_until_ready((l0, l1, l2))
    r0, r1, r2 = reference(x, ws, bs)
    assert l0.shape == (B, 1) and l1.shape == (B, 1) and l2.shape == (B, 1)
    assert jnp.allclose(l0, r0, atol=1e-4)
    assert jnp.allclose(l1, r1, atol=1e-4)
    assert jnp.allclose(l2, r2, atol=1e-4)

    # Multi-tile grid + ragged last tile (B not a multiple of the tile), f32 features.
    B2 = 300
    x2 = jax.random.normal(k_x2, (B2, FEATURE_DIM), dtype=jnp.float32)
    m0, m1, m2 = multihead_vit_heads(x2, w_stacked, b_stacked, tb=128)
    jax.block_until_ready((m0, m1, m2))
    s0, s1, s2 = reference(x2, ws, bs)
    assert m0.shape == (B2, 1) and m1.shape == (B2, 1) and m2.shape == (B2, 1)
    assert jnp.allclose(m0, s0, atol=1e-4)
    assert jnp.allclose(m1, s1, atol=1e-4)
    assert jnp.allclose(m2, s2, atol=1e-4)

    # bf16 features straight from a backbone (no wrapper-side cast at all), default tile:
    # exercises the 2-tile grid split for the v7x megacore path.
    n0, n1, n2 = multihead_vit_heads(x2.astype(jnp.bfloat16), w_stacked, b_stacked)
    jax.block_until_ready((n0, n1, n2))
    assert jnp.allclose(n0, s0, atol=1e-4)
    assert jnp.allclose(n1, s1, atol=1e-4)
    assert jnp.allclose(n2, s2, atol=1e-4)

    print("KERNEL_OK")
</pallas_src>

<mosaic_0001>
module attributes {stable_mosaic.version = 11 : i64} {
  func.func @multihead_kernel(%arg0: i32, %arg1: memref<2x768xf32, #tpu.memory_space<vmem>>, %arg2: memref<768x8xbf16, #tpu.memory_space<vmem>>, %arg3: memref<1x8xf32, #tpu.memory_space<vmem>>, %arg4: memref<2x8xf32, #tpu.memory_space<vmem>>) attributes {dimension_semantics = [#tpu.dimension_semantics<parallel>], iteration_bounds = array<i64: 1>, scalar_prefetch = 0 : i64, scratch_operands = 0 : i64, tpu.core_type = #tpu.core_type<tc>, window_params = [{transform_indices = @transform_0, window_bounds = array<i64: 2, 768>}, {pipeline_mode = #tpu.pipeline_mode<synchronous>, transform_indices = @transform_1, window_bounds = array<i64: 768, 8>}, {pipeline_mode = #tpu.pipeline_mode<synchronous>, transform_indices = @transform_2, window_bounds = array<i64: 1, 8>}, {transform_indices = @transform_3, window_bounds = array<i64: 2, 8>}]} {
    %c0 = arith.constant 0 : index
    %c0_0 = arith.constant 0 : index
    %0 = vector.load %arg1[%c0, %c0_0] : memref<2x768xf32, #tpu.memory_space<vmem>>, vector<2x768xf32>
    %1 = arith.truncf %0 : vector<2x768xf32> to vector<2x768xbf16>
    %c0_1 = arith.constant 0 : index
    %c0_2 = arith.constant 0 : index
    %2 = vector.load %arg2[%c0_1, %c0_2] : memref<768x8xbf16, #tpu.memory_space<vmem>>, vector<768x8xbf16>
    %cst = arith.constant dense<0.000000e+00> : vector<2x8xf32>
    %3 = tpu.matmul %1, %2, %cst {dimension_numbers = #tpu.dot_dimension_numbers<[1], [0], [0], [1], [0, 0, 1, 1], [], []>} : vector<2x768xbf16>, vector<768x8xbf16>, vector<2x8xf32> -> vector<2x8xf32>
    %c0_3 = arith.constant 0 : index
    %c0_4 = arith.constant 0 : index
    %4 = vector.load %arg3[%c0_3, %c0_4] : memref<1x8xf32, #tpu.memory_space<vmem>>, vector<1x8xf32>
    %5 = vector.broadcast %4 : vector<1x8xf32> to vector<2x8xf32>
    %6 = arith.addf %3, %5 : vector<2x8xf32>
    %7 = arith.negf %6 : vector<2x8xf32>
    %8 = math.exp %7 : vector<2x8xf32>
    %cst_5 = arith.constant 1.000000e+00 : f32
    %9 = vector.broadcast %cst_5 : f32 to vector<2x8xf32>
    %10 = arith.addf %9, %8 : vector<2x8xf32>
    %11 = arith.divf %9, %10 : vector<2x8xf32>
    %c0_6 = arith.constant 0 : index
    %c0_7 = arith.constant 0 : index
    %12 = vector.load %arg4[%c0_6, %c0_7] : memref<2x8xf32, #tpu.memory_space<vmem>>, vector<2x8xf32>
    tpu.vector_store %arg4[%c0_6, %c0_7], %11 {strides = array<i32>} : memref<2x8xf32, #tpu.memory_space<vmem>>, vector<2x8xf32>,
    return
  }
  func.func @transform_0(%arg0: i32) -> (i32, i32) {
    %c0_i32 = arith.constant 0 : i32
    %c0_i32_0 = arith.constant 0 : i32
    return %arg0, %c0_i32 : i32, i32
  }
  func.func @transform_1(%arg0: i32) -> (i32, i32) {
    %c0_i32 = arith.constant 0 : i32
    %c0_i32_0 = arith.constant 0 : i32
    %c0_i32_1 = arith.constant 0 : i32
    return %c0_i32, %c0_i32_0 : i32, i32
  }
  func.func @transform_2(%arg0: i32) -> (i32, i32) {
    %c0_i32 = arith.constant 0 : i32
    %c0_i32_0 = arith.constant 0 : i32
    %c0_i32_1 = arith.constant 0 : i32
    return %c0_i32, %c0_i32_0 : i32, i32
  }
  func.func @transform_3(%arg0: i32) -> (i32, i32) {
    %c0_i32 = arith.constant 0 : i32
    %c0_i32_0 = arith.constant 0 : i32
    return %arg0, %c0_i32 : i32, i32
  }
}

</mosaic_0001>

<llo_original>
// kernel: tpu_custom_call.1
$region0: #{tpu_custom_call.1}
  #allocation0 [shape = 'u32[]', space=smem, size = 0x4, offset = 0x4, fixed_abs, tag = 'smem constant byte address 0x4 - core index']
  #allocation1 [shape = 'u32[72,128]{1,0:T(1,128)}', space=vmem, size = 0x9000, scoped, tag = 'internal scratch']
  %s0 = inlined_call_operand.vmem [shape: f32[2,768], index: 0, kind: input, shape index: {}]
  %s1 = inlined_call_operand.vmem [shape: bf16[768,8], index: 1, kind: input, shape index: {}]
  %s2 = inlined_call_operand.vmem [shape: f32[1,8], index: 2, kind: input, shape index: {}]
  %s3 = inlined_call_operand.hbm [shape: f32[2,8], index: 3, kind: output, shape index: {}]
  %s4 = sld [smem:[#allocation0]]
  $region22: #{tpu_custom_call.1} parent=0
    _
  %s6 = ssub.s32 1, %s4
  %s7 = scalar_select 0, %s6, %s4
  $region1: #{tpu_custom_call.1} parent=0
    #allocation2 [shape = 'u8[1024]{0}', space=vmem, size = 0x400, scoped, tag = 'output window, operand 0, single buffered']
    #allocation3 [shape = 's32[1]{0}', space=sflag, size = 0x4, scoped, tag = 'scoped memory for tpu_custom_call.1']
    %8 = vsyncpa [#allocation3], 0
    // Predicated region
    $region2: #{tpu_custom_call.1} parent=1 // pred_check
      _
    $region3: #{tpu_custom_call.1} parent=1 // pred_check_branch
      %10 = sbr.rel (0) target = $region5
    $region4: #{tpu_custom_call.1} parent=1 // pred_region
      _
    $region5: #{tpu_custom_call.1} parent=1 // pred_fallthru
      _
    // Predicated region
    $region6: #{tpu_custom_call.1} parent=1 // pred_check
      _
    $region7: #{tpu_custom_call.1} parent=1 // pred_check_branch
      %12 = sbr.rel (0) target = $region9
    $region8: #{tpu_custom_call.1} parent=1 // pred_region
      _
    $region9: #{tpu_custom_call.1} parent=1 // pred_fallthru
      _
    // Predicated region
    $region10: #{tpu_custom_call.1} parent=1 // pred_check
      _
    $region11: #{tpu_custom_call.1} parent=1 // pred_check_branch
      %14 = sbr.rel (0) target = $region13
    $region12: #{tpu_custom_call.1} parent=1 // pred_region
      _
    $region13: #{tpu_custom_call.1} parent=1 // pred_fallthru
      _
    %v15 = vld [vmem:[%s0] sm:$0xff]
    %v16 = vld [vmem:[%s0 + $0x8] sm:$0xf]
    %19 = vst [vmem:[#allocation1] ss:$4 sm:$0xff] %v15
    %s20 = scalar_lea.vmem [#allocation1], 32
    %21 = vst [vmem:[%s20] ss:$4 sm:$0xff] %v16
    %v22 = vld.sshfl [vmem:[#allocation1] sm:$0xff pattern:$0x73625140]
    %v23 = vld.sshfl [vmem:[#allocation1 + $0x8] sm:$0xff pattern:$0x73625140]
    %v24 = vld.sshfl [vmem:[#allocation1 + $0x10] sm:$0xff pattern:$0x73625140]
    %v25 = vld.sshfl [vmem:[#allocation1 + $0x18] sm:$0xff pattern:$0x73625140]
    %v26 = vld.sshfl [vmem:[#allocation1 + $0x20] sm:$0xff pattern:$0x73625140]
    %v27 = vld.sshfl [vmem:[#allocation1 + $0x28] sm:$0xff pattern:$0x73625140]
    %v34 = vpack.c.bf16 %v22, %v22
    %v35 = vpack.c.bf16 %v23, %v23
    %v36 = vpack.c.bf16 %v24, %v24
    %v37 = vpack.c.bf16 %v25, %v25
    %v38 = vpack.c.bf16 %v26, %v26
    %v39 = vpack.c.bf16 %v27, %v27
    %v40 = vld [vmem:[%s1] sm:$0xf]
    %v41 = vld [vmem:[%s1 + $0x4] sm:$0xf]
    %v42 = vld [vmem:[%s1 + $0x8] sm:$0xf]
    %v43 = vld [vmem:[%s1 + $0xc] sm:$0xf]
    %v44 = vld [vmem:[%s1 + $0x10] sm:$0xf]
    %v45 = vld [vmem:[%s1 + $0x14] sm:$0xf]
    %v46 = vld [vmem:[%s1 + $0x18] sm:$0xf]
    %v47 = vld [vmem:[%s1 + $0x1c] sm:$0xf]
    %v48 = vld [vmem:[%s1 + $0x20] sm:$0xf]
    %v49 = vld [vmem:[%s1 + $0x24] sm:$0xf]
    %v50 = vld [vmem:[%s1 + $0x28] sm:$0xf]
    %v51 = vld [vmem:[%s1 + $0x2c] sm:$0xf]
    %v52 = vld [vmem:[%s1 + $0x30] sm:$0xf]
    %v53 = vld [vmem:[%s1 + $0x34] sm:$0xf]
    %v54 = vld [vmem:[%s1 + $0x38] sm:$0xf]
    %v55 = vld [vmem:[%s1 + $0x3c] sm:$0xf]
    %v56 = vld [vmem:[%s1 + $0x40] sm:$0xf]
    %v57 = vld [vmem:[%s1 + $0x44] sm:$0xf]
    %v58 = vld [vmem:[%s1 + $0x48] sm:$0xf]
    %v59 = vld [vmem:[%s1 + $0x4c] sm:$0xf]
    %v60 = vld [vmem:[%s1 + $0x50] sm:$0xf]
    %v61 = vld [vmem:[%s1 + $0x54] sm:$0xf]
    %v62 = vld [vmem:[%s1 + $0x58] sm:$0xf]
    %v63 = vld [vmem:[%s1 + $0x5c] sm:$0xf]
    %v64 = vld [vmem:[%s1 + $0x60] sm:$0xf]
    %v65 = vld [vmem:[%s1 + $0x64] sm:$0xf]
    %v66 = vld [vmem:[%s1 + $0x68] sm:$0xf]
    %v67 = vld [vmem:[%s1 + $0x6c] sm:$0xf]
    %v68 = vld [vmem:[%s1 + $0x70] sm:$0xf]
    %v69 = vld [vmem:[%s1 + $0x74] sm:$0xf]
    %v70 = vld [vmem:[%s1 + $0x78] sm:$0xf]
    %v71 = vld [vmem:[%s1 + $0x7c] sm:$0xf]
    %v72 = vld [vmem:[%s1 + $0x80] sm:$0xf]
    %v73 = vld [vmem:[%s1 + $0x84] sm:$0xf]
    %v74 = vld [vmem:[%s1 + $0x88] sm:$0xf]
    %v75 = vld [vmem:[%s1 + $0x8c] sm:$0xf]
    %v76 = vld [vmem:[%s1 + $0x90] sm:$0xf]
    %v77 = vld [vmem:[%s1 + $0x94] sm:$0xf]
    %v78 = vld [vmem:[%s1 + $0x98] sm:$0xf]
    %v79 = vld [vmem:[%s1 + $0x9c] sm:$0xf]
    %v80 = vld [vmem:[%s1 + $0xa0] sm:$0xf]
    %v81 = vld [vmem:[%s1 + $0xa4] sm:$0xf]
    %v82 = vld [vmem:[%s1 + $0xa8] sm:$0xf]
    %v83 = vld [vmem:[%s1 + $0xac] sm:$0xf]
    %v84 = vld [vmem:[%s1 + $0xb0] sm:$0xf]
    %v85 = vld [vmem:[%s1 + $0xb4] sm:$0xf]
    %v86 = vld [vmem:[%s1 + $0xb8] sm:$0xf]
    %v87 = vld [vmem:[%s1 + $0xbc] sm:$0xf]
    %v88 = vld [vmem:[%s1 + $0xc0] sm:$0xf]
    %v89 = vld [vmem:[%s1 + $0xc4] sm:$0xf]
    %v90 = vld [vmem:[%s1 + $0xc8] sm:$0xf]
    %v91 = vld [vmem:[%s1 + $0xcc] sm:$0xf]
    %v92 = vld [vmem:[%s1 + $0xd0] sm:$0xf]
    %v93 = vld [vmem:[%s1 + $0xd4] sm:$0xf]
    %v94 = vld [vmem:[%s1 + $0xd8] sm:$0xf]
    %v95 = vld [vmem:[%s1 + $0xdc] sm:$0xf]
    %v96 = vld [vmem:[%s1 + $0xe0] sm:$0xf]
    %v97 = vld [vmem:[%s1 + $0xe4] sm:$0xf]
    %v98 = vld [vmem:[%s1 + $0xe8] sm:$0xf]
    %v99 = vld [vmem:[%s1 + $0xec] sm:$0xf]
    %v100 = vld [vmem:[%s1 + $0xf0] sm:$0xf]
    %v101 = vld [vmem:[%s1 + $0xf4] sm:$0xf]
    %v102 = vld [vmem:[%s1 + $0xf8] sm:$0xf]
    %v103 = vld [vmem:[%s1 + $0xfc] sm:$0xf]
    %v104 = vld [vmem:[%s1 + $0x100] sm:$0xf]
    %v105 = vld [vmem:[%s1 + $0x104] sm:$0xf]
    %v106 = vld [vmem:[%s1 + $0x108] sm:$0xf]
    %v107 = vld [vmem:[%s1 + $0x10c] sm:$0xf]
    %v108 = vld [vmem:[%s1 + $0x110] sm:$0xf]
    %v109 = vld [vmem:[%s1 + $0x114] sm:$0xf]
    %v110 = vld [vmem:[%s1 + $0x118] sm:$0xf]
    %v111 = vld [vmem:[%s1 + $0x11c] sm:$0xf]
    %v112 = vld [vmem:[%s1 + $0x120] sm:$0xf]
    %v113 = vld [vmem:[%s1 + $0x124] sm:$0xf]
    %v114 = vld [vmem:[%s1 + $0x128] sm:$0xf]
    %v115 = vld [vmem:[%s1 + $0x12c] sm:$0xf]
    %v116 = vld [vmem:[%s1 + $0x130] sm:$0xf]
    %v117 = vld [vmem:[%s1 + $0x134] sm:$0xf]
    %v118 = vld [vmem:[%s1 + $0x138] sm:$0xf]
    %v119 = vld [vmem:[%s1 + $0x13c] sm:$0xf]
    %v120 = vld [vmem:[%s1 + $0x140] sm:$0xf]
    %v121 = vld [vmem:[%s1 + $0x144] sm:$0xf]
    %v122 = vld [vmem:[%s1 + $0x148] sm:$0xf]
    %v123 = vld [vmem:[%s1 + $0x14c] sm:$0xf]
    %v124 = vld [vmem:[%s1 + $0x150] sm:$0xf]
    %v125 = vld [vmem:[%s1 + $0x154] sm:$0xf]
    %v126 = vld [vmem:[%s1 + $0x158] sm:$0xf]
    %v127 = vld [vmem:[%s1 + $0x15c] sm:$0xf]
    %v128 = vld [vmem:[%s1 + $0x160] sm:$0xf]
    %v129 = vld [vmem:[%s1 + $0x164] sm:$0xf]
    %v130 = vld [vmem:[%s1 + $0x168] sm:$0xf]
    %v131 = vld [vmem:[%s1 + $0x16c] sm:$0xf]
    %v132 = vld [vmem:[%s1 + $0x170] sm:$0xf]
    %v133 = vld [vmem:[%s1 + $0x174] sm:$0xf]
    %v134 = vld [vmem:[%s1 + $0x178] sm:$0xf]
    %v135 = vld [vmem:[%s1 + $0x17c] sm:$0xf]
    %v136 = vld [vmem:[%s2] sm:$0x1]
    %v138 = vperm.slane %v136, 0
    %v236 = vunpack.c.l.b16 %v40
    %v237 = vunpack.c.l.b16 %v41
    %v238 = vunpack.c.l.b16 %v42
    %v239 = vunpack.c.l.b16 %v43
    %v240 = vunpack.c.l.b16 %v44
    %v241 = vunpack.c.l.b16 %v45
    %v242 = vunpack.c.l.b16 %v46
    %v243 = vunpack.c.l.b16 %v47
    %v244 = vunpack.c.l.b16 %v48
    %v245 = vunpack.c.l.b16 %v49
    %v246 = vunpack.c.l.b16 %v50
    %v247 = vunpack.c.l.b16 %v51
    %v248 = vunpack.c.l.b16 %v52
    %v249 = vunpack.c.l.b16 %v53
    %v250 = vunpack.c.l.b16 %v54
    %v251 = vunpack.c.l.b16 %v55
    %v252 = vunpack.c.l.b16 %v56
    %v253 = vunpack.c.l.b16 %v57
    %v254 = vunpack.c.l.b16 %v58
    %v255 = vunpack.c.l.b16 %v59
    %v256 = vunpack.c.l.b16 %v60
    %v257 = vunpack.c.l.b16 %v61
    %v258 = vunpack.c.l.b16 %v62
    %v259 = vunpack.c.l.b16 %v63
    %v260 = vunpack.c.l.b16 %v64
    %v261 = vunpack.c.l.b16 %v65
    %v262 = vunpack.c.l.b16 %v66
    %v263 = vunpack.c.l.b16 %v67
    %v264 = vunpack.c.l.b16 %v68
    %v265 = vunpack.c.l.b16 %v69
    %v266 = vunpack.c.l.b16 %v70
    %v267 = vunpack.c.l.b16 %v71
    %v268 = vunpack.c.l.b16 %v72
    %v269 = vunpack.c.l.b16 %v73
    %v270 = vunpack.c.l.b16 %v74
    %v271 = vunpack.c.l.b16 %v75
    %v272 = vunpack.c.l.b16 %v76
    %v273 = vunpack.c.l.b16 %v77
    %v274 = vunpack.c.l.b16 %v78
    %v275 = vunpack.c.l.b16 %v79
    %v276 = vunpack.c.l.b16 %v80
    %v277 = vunpack.c.l.b16 %v81
    %v278 = vunpack.c.l.b16 %v82
    %v279 = vunpack.c.l.b16 %v83
    %v280 = vunpack.c.l.b16 %v84
    %v281 = vunpack.c.l.b16 %v85
    %v282 = vunpack.c.l.b16 %v86
    %v283 = vunpack.c.l.b16 %v87
    %v284 = vunpack.c.l.b16 %v88
    %v285 = vunpack.c.l.b16 %v89
    %v286 = vunpack.c.l.b16 %v90
    %v287 = vunpack.c.l.b16 %v91
    %v288 = vunpack.c.l.b16 %v92
    %v289 = vunpack.c.l.b16 %v93
    %v290 = vunpack.c.l.b16 %v94
    %v291 = vunpack.c.l.b16 %v95
    %v292 = vunpack.c.l.b16 %v96
    %v293 = vunpack.c.l.b16 %v97
    %v294 = vunpack.c.l.b16 %v98
    %v295 = vunpack.c.l.b16 %v99
    %v296 = vunpack.c.l.b16 %v100
    %v297 = vunpack.c.l.b16 %v101
    %v298 = vunpack.c.l.b16 %v102
    %v299 = vunpack.c.l.b16 %v103
    %v300 = vunpack.c.l.b16 %v104
    %v301 = vunpack.c.l.b16 %v105
    %v302 = vunpack.c.l.b16 %v106
    %v303 = vunpack.c.l.b16 %v107
    %v304 = vunpack.c.l.b16 %v108
    %v305 = vunpack.c.l.b16 %v109
    %v306 = vunpack.c.l.b16 %v110
    %v307 = vunpack.c.l.b16 %v111
    %v308 = vunpack.c.l.b16 %v112
    %v309 = vunpack.c.l.b16 %v113
    %v310 = vunpack.c.l.b16 %v114
    %v311 = vunpack.c.l.b16 %v115
    %v312 = vunpack.c.l.b16 %v116
    %v313 = vunpack.c.l.b16 %v117
    %v314 = vunpack.c.l.b16 %v118
    %v315 = vunpack.c.l.b16 %v119
    %v316 = vunpack.c.l.b16 %v120
    %v317 = vunpack.c.l.b16 %v121
    %v318 = vunpack.c.l.b16 %v122
    %v319 = vunpack.c.l.b16 %v123
    %v320 = vunpack.c.l.b16 %v124
    %v321 = vunpack.c.l.b16 %v125
    %v322 = vunpack.c.l.b16 %v126
    %v323 = vunpack.c.l.b16 %v127
    %v324 = vunpack.c.l.b16 %v128
    %v325 = vunpack.c.l.b16 %v129
    %v326 = vunpack.c.l.b16 %v130
    %v327 = vunpack.c.l.b16 %v131
    %v328 = vunpack.c.l.b16 %v132
    %v329 = vunpack.c.l.b16 %v133
    %v330 = vunpack.c.l.b16 %v134
    %v331 = vunpack.c.l.b16 %v135
    %v332 = vpack.c.b16 %v237, %v236
    %v333 = vpack.c.b16 %v239, %v238
    %v334 = vpack.c.b16 %v241, %v240
    %v335 = vpack.c.b16 %v243, %v242
    %v336 = vpack.c.b16 %v245, %v244
    %v337 = vpack.c.b16 %v247, %v246
    %v338 = vpack.c.b16 %v249, %v248
    %v339 = vpack.c.b16 %v251, %v250
    %v340 = vpack.c.b16 %v253, %v252
    %v341 = vpack.c.b16 %v255, %v254
    %v342 = vpack.c.b16 %v257, %v256
    %v343 = vpack.c.b16 %v259, %v258
    %v344 = vpack.c.b16 %v261, %v260
    %v345 = vpack.c.b16 %v263, %v262
    %v346 = vpack.c.b16 %v265, %v264
    %v347 = vpack.c.b16 %v267, %v266
    %v348 = vpack.c.b16 %v269, %v268
    %v349 = vpack.c.b16 %v271, %v270
    %v350 = vpack.c.b16 %v273, %v272
    %v351 = vpack.c.b16 %v275, %v274
    %v352 = vpack.c.b16 %v277, %v276
    %v353 = vpack.c.b16 %v279, %v278
    %v354 = vpack.c.b16 %v281, %v280
    %v355 = vpack.c.b16 %v283, %v282
    %v356 = vpack.c.b16 %v285, %v284
    %v357 = vpack.c.b16 %v287, %v286
    %v358 = vpack.c.b16 %v289, %v288
    %v359 = vpack.c.b16 %v291, %v290
    %v360 = vpack.c.b16 %v293, %v292
    %v361 = vpack.c.b16 %v295, %v294
    %v362 = vpack.c.b16 %v297, %v296
    %v363 = vpack.c.b16 %v299, %v298
    %v364 = vpack.c.b16 %v301, %v300
    %v365 = vpack.c.b16 %v303, %v302
    %v366 = vpack.c.b16 %v305, %v304
    %v367 = vpack.c.b16 %v307, %v306
    %v368 = vpack.c.b16 %v309, %v308
    %v369 = vpack.c.b16 %v311, %v310
    %v370 = vpack.c.b16 %v313, %v312
    %v371 = vpack.c.b16 %v315, %v314
    %v372 = vpack.c.b16 %v317, %v316
    %v373 = vpack.c.b16 %v319, %v318
    %v374 = vpack.c.b16 %v321, %v320
    %v375 = vpack.c.b16 %v323, %v322
    %v376 = vpack.c.b16 %v325, %v324
    %v377 = vpack.c.b16 %v327, %v326
    %v378 = vpack.c.b16 %v329, %v328
    %v379 = vpack.c.b16 %v331, %v330
    %428 = vmatpush.bf16.msra.mxu0 %v339
    %429 = vmatpush.bf16.msra.mxu0 %v338
    %430 = vmatpush.bf16.msra.mxu0 %v337
    %431 = vmatpush.bf16.msra.mxu0 %v336
    %432 = vmatpush.bf16.msra.mxu0 %v335
    %433 = vmatpush.bf16.msra.mxu0 %v334
    %434 = vmatpush.bf16.msra.mxu0 %v333
    %435 = vmatpush.bf16.msra.mxu0 %v332
    %436 = vmatmul.bf16.gmra.mxu0 %v34
    %v437 = vpop.f32.mrf.mxu0
    %v438 = vadd.f32 %v138, %v437
    %v439 = vpop.f32.mrf.mxu0
    %440 = vdwg.mxu0
    %441 = vmatpush.bf16.msra.mxu0 %v347
    %442 = vmatpush.bf16.msra.mxu0 %v346
    %443 = vmatpush.bf16.msra.mxu0 %v345
    %444 = vmatpush.bf16.msra.mxu0 %v344
    %445 = vmatpush.bf16.msra.mxu0 %v343
    %446 = vmatpush.bf16.msra.mxu0 %v342
    %447 = vmatpush.bf16.msra.mxu0 %v341
    %448 = vmatpush.bf16.msra.mxu0 %v340
    %449 = vmatmul.bf16.gmra.mxu0 %v35
    %v450 = vpop.f32.mrf.mxu0
    %v451 = vadd.f32 %v438, %v450
    %v452 = vpop.f32.mrf.mxu0
    %453 = vdwg.mxu0
    %454 = vmatpush.bf16.msra.mxu0 %v355
    %455 = vmatpush.bf16.msra.mxu0 %v354
    %456 = vmatpush.bf16.msra.mxu0 %v353
    %457 = vmatpush.bf16.msra.mxu0 %v352
    %458 = vmatpush.bf16.msra.mxu0 %v351
    %459 = vmatpush.bf16.msra.mxu0 %v350
    %460 = vmatpush.bf16.msra.mxu0 %v349
    %461 = vmatpush.bf16.msra.mxu0 %v348
    %462 = vmatmul.bf16.gmra.mxu0 %v36
    %v463 = vpop.f32.mrf.mxu0
    %v464 = vadd.f32 %v451, %v463
    %v465 = vpop.f32.mrf.mxu0
    %466 = vdwg.mxu0
    %467 = vmatpush.bf16.msra.mxu0 %v363
    %468 = vmatpush.bf16.msra.mxu0 %v362
    %469 = vmatpush.bf16.msra.mxu0 %v361
    %470 = vmatpush.bf16.msra.mxu0 %v360
    %471 = vmatpush.bf16.msra.mxu0 %v359
    %472 = vmatpush.bf16.msra.mxu0 %v358
    %473 = vmatpush.bf16.msra.mxu0 %v357
    %474 = vmatpush.bf16.msra.mxu0 %v356
    %475 = vmatmul.bf16.gmra.mxu0 %v37
    %v476 = vpop.f32.mrf.mxu0
    %v477 = vadd.f32 %v464, %v476
    %v478 = vpop.f32.mrf.mxu0
    %479 = vdwg.mxu0
    %480 = vmatpush.bf16.msra.mxu0 %v371
    %481 = vmatpush.bf16.msra.mxu0 %v370
    %482 = vmatpush.bf16.msra.mxu0 %v369
    %483 = vmatpush.bf16.msra.mxu0 %v368
    %484 = vmatpush.bf16.msra.mxu0 %v367
    %485 = vmatpush.bf16.msra.mxu0 %v366
    %486 = vmatpush.bf16.msra.mxu0 %v365
    %487 = vmatpush.bf16.msra.mxu0 %v364
    %488 = vmatmul.bf16.gmra.mxu0 %v38
    %v489 = vpop.f32.mrf.mxu0
    %v490 = vadd.f32 %v477, %v489
    %v491 = vpop.f32.mrf.mxu0
    %492 = vdwg.mxu0
    %493 = vmatpush.bf16.msra.mxu0 %v379
    %494 = vmatpush.bf16.msra.mxu0 %v378
    %495 = vmatpush.bf16.msra.mxu0 %v377
    %496 = vmatpush.bf16.msra.mxu0 %v376
    %497 = vmatpush.bf16.msra.mxu0 %v375
    %498 = vmatpush.bf16.msra.mxu0 %v374
    %499 = vmatpush.bf16.msra.mxu0 %v373
    %500 = vmatpush.bf16.msra.mxu0 %v372
    %501 = vmatmul.bf16.gmra.mxu0 %v39
    %v502 = vpop.f32.mrf.mxu0
    %v503 = vadd.f32 %v490, %v502
    %v504 = vpop.f32.mrf.mxu0
    %505 = vdwg.mxu0
    %v506 = vxor.u32 %v503, 2147483648
    %v507 = vmul.f32 %v506, 1.442695
    %v508 = vpow.pop %v507
    %v509 = vadd.f32 %v508, 1.0
    %v510 = vrcp.pop %v509
    %v511 = vmul.f32 %v509, %v510
    %v512 = vsub.f32 1.0, %v511
    %v513 = vmul.f32 %v510, %v512
    %v514 = vadd.f32 %v510, %v513
    %vm515 = vweird.f32 %v509
    %vm516 = vweird.f32 %v510
    %vm517 = vmor %vm515, %vm516
    %v518 = vsel %vm517, %v510, %v514
    %v519 = vand.u32 2147483647, %v509
    %vm520 = vcmp.eq.f32.partialorder %v519, 8.507059e+37
    %v521 = vand.u32 %v509, 2147483648
    %v522 = vor.u32 1.1754944e-38, %v521
    %v523 = vsel %vm520, %v522, %v518
    %v524 = vmul.f32 1.0, %v523
    %vm525 = vcmask 58368
    %526 = vst.msk [vmem:[#allocation2] sm:$0x3] %vm525, %v524
    // Predicated region
    $region14: #{tpu_custom_call.1} parent=1 // pred_check
      _
    $region15: #{tpu_custom_call.1} parent=1 // pred_check_branch
      %528 = sbr.rel (0) target = $region17
    $region16: #{tpu_custom_call.1} parent=1 // pred_region
      %530 = vsyncadd [#allocation3], 0
      %s532 = sshll.u32 [#allocation2], 4
      %s533 = int_to_ptr.vmem [resolvable:$true] %s532
      %s534 = sshll.u32 %s3, 4
      %s535 = int_to_ptr.hbm [resolvable:$true] %s534
      %537 = dma.vmem_to_hbm [thread:$0]  %s533, 32, %s535, [#allocation3]
    $region17: #{tpu_custom_call.1} parent=1 // pred_fallthru
      _
    // Predicated region
    $region18: #{tpu_custom_call.1} parent=1 // pred_check
      _
    $region19: #{tpu_custom_call.1} parent=1 // pred_check_branch
      %539 = sbr.rel (0) target = $region21
    $region20: #{tpu_custom_call.1} parent=1 // pred_region
      %541 = dma.done [#allocation3], 32
    $region21: #{tpu_custom_call.1} parent=1 // pred_fallthru
      _
    %542 = vsyncpa [#allocation3], 1

</llo_original>
